<compile_context>
chip_gen: v7x
topology: tpu7x:2x2x1
jax: 0.10.0
libtpu: 0.0.40
codegen_flags: <defaults>
</compile_context>

<pallas_src>
from typing import NamedTuple

import jax
import jax.numpy as jnp
from jax.experimental import pallas as pl
from jax.experimental.pallas import tpu as pltpu


_LANE = 128
_SUBLANE = 8
_MAX_VMEM_BUDGET = 96 * 1024 * 1024


def _round_up(x, m):
    return ((x + m - 1) // m) * m


def _vmem_budget_bytes():
    """Chip-aware VMEM budget: ~75% of per-core physical VMEM, capped at 96 MiB.
    v5e/v6e (128 MiB) -> 96 MiB; v7x (64 MiB) -> 48 MiB."""
    try:
        cap = int(pltpu.get_tpu_info().vmem_capacity_bytes)
    except Exception:
        cap = 64 * 1024 * 1024  # conservative fallback: smallest per-core VMEM (v7x)
    return min((cap * 3) // 4, _MAX_VMEM_BUDGET)


def _choose_tile_b(batch, obs_dim, f_pad, a_pad, budget, feat_itemsize, q_itemsize,
                   single_buffer_weights=True):
    """Largest batch tile (multiple of 8) whose working set fits the VMEM budget.
    The tile is capped at ceil(B/2) (rounded to 8) so the "parallel" batch axis has
    >= 2 grid steps and shards across v7x's two TensorCores."""
    cap = _round_up(batch, _SUBLANE)
    if cap >= 2 * _SUBLANE:
        cap = min(cap, _round_up(pl.cdiv(cap, 2), _SUBLANE))
    wbuf = 1 if single_buffer_weights else 2
    weight_bytes = wbuf * (obs_dim * f_pad * 2 + f_pad * a_pad * 2 + (f_pad + a_pad) * 4)
    for tb in (4096, 2048, 1024, 512, 256, 128, 64, 32, 16, 8):
        # f32 obs tile in + feat/q tiles out, each double-buffered by the pipeline.
        per_tile = tb * (obs_dim * 4 + f_pad * feat_itemsize + a_pad * q_itemsize)
        if weight_bytes + 2 * per_tile <= budget:
            return min(tb, cap)
    return min(8, cap)


class QNetworkParams(NamedTuple):
    w1: jax.Array        # (obs_dim, F_pad) bf16
    b1: jax.Array        # (1, F_pad)       f32
    w2: jax.Array        # (F_pad, A_pad)   bf16
    b2: jax.Array        # (1, A_pad)       f32
    features_dim: int
    action_dim: int


def prepare_qnetwork_params(w_repr, b_repr, w_q, b_q):
    """One-time preprocessing (do this at init, NOT per forward call):
    zero-pad F/A to multiples of 128 (lane-dense stores) and cast weights to bf16
    (MXU-native).  Zero padding keeps the math exact: padded feature columns are
    relu(0+0)=0 and padded action columns are 0 (sliced off after the kernel)."""
    obs_dim, F = w_repr.shape
    A = w_q.shape[-1]
    f_pad = _round_up(F, _LANE)
    a_pad = _round_up(A, _LANE)
    w1 = jnp.zeros((obs_dim, f_pad), jnp.bfloat16).at[:, :F].set(w_repr.astype(jnp.bfloat16))
    b1 = jnp.zeros((1, f_pad), jnp.float32).at[:, :F].set(
        jnp.reshape(b_repr, (1, F)).astype(jnp.float32))
    w2 = jnp.zeros((f_pad, a_pad), jnp.bfloat16).at[:F, :A].set(w_q.astype(jnp.bfloat16))
    b2 = jnp.zeros((1, a_pad), jnp.float32).at[:, :A].set(
        jnp.reshape(b_q, (1, A)).astype(jnp.float32))
    return QNetworkParams(w1=w1, b1=b1, w2=w2, b2=b2, features_dim=F, action_dim=A)


def _qnetwork_kernel(obs_ref, w1_ref, b1_ref, w2_ref, b2_ref, feat_ref, q_ref):
    # obs arrives in f32; the bf16 cast happens here on the VPU (hidden under the DMAs)
    # instead of as a separate un-fused HBM pass in the wrapper.
    x = obs_ref[...].astype(jnp.bfloat16)                       # (TB, obs_dim)

    # representation_module: Linear + ReLU (MXU matmul, f32 accumulate; bias/ReLU on VPU).
    h = jnp.dot(x, w1_ref[...], preferred_element_type=jnp.float32)
    feat = jnp.maximum(h + b1_ref[...], 0.0)                    # (TB, F_pad) f32
    feat_ref[...] = feat.astype(feat_ref.dtype)                 # bf16 writeback by default

    # q_net: Linear(features_dim -> action_dim); second matmul consumes bf16 features.
    q = jnp.dot(feat.astype(w2_ref.dtype), w2_ref[...],
                preferred_element_type=jnp.float32)
    q_ref[...] = (q + b2_ref[...]).astype(q_ref.dtype)          # (TB, A_pad)


def _resident_spec(shape, single_buffer):
    # Constant index_map -> block is DMA'd once and stays VMEM-resident.
    # Buffered(1) drops the wasted second buffer (frees VMEM for bigger batch tiles).
    if single_buffer:
        return pl.BlockSpec(shape, lambda i: (0, 0), pipeline_mode=pl.Buffered(1))
    return pl.BlockSpec(shape, lambda i: (0, 0))


def _build_call(obs_dim, tile_b, nb, b_pad, f_pad, a_pad,
                features_dtype, q_dtype, vmem_limit, single_buffer):
    return pl.pallas_call(
        _qnetwork_kernel,
        out_shape=(
            jax.ShapeDtypeStruct((b_pad, f_pad), features_dtype),
            jax.ShapeDtypeStruct((b_pad, a_pad), q_dtype),
        ),
        grid=(nb,),
        in_specs=[
            pl.BlockSpec((tile_b, obs_dim), lambda i: (i, 0)),    # streamed batch tiles
            _resident_spec((obs_dim, f_pad), single_buffer),      # VMEM-resident weights
            _resident_spec((1, f_pad), single_buffer),
            _resident_spec((f_pad, a_pad), single_buffer),
            _resident_spec((1, a_pad), single_buffer),
        ],
        out_specs=(
            pl.BlockSpec((tile_b, f_pad), lambda i: (i, 0)),
            pl.BlockSpec((tile_b, a_pad), lambda i: (i, 0)),
        ),
        compiler_params=pltpu.CompilerParams(
            dimension_semantics=("parallel",),        # megacore sharding on v7x
            vmem_limit_bytes=int(vmem_limit),
        ),
    )


_single_buffer_weights_ok = True   # flipped off once if pipeline_mode=Buffered(1) is unsupported


def qnetwork_forward(obs, params, *, tile_b=None,
                     features_dtype=jnp.bfloat16, q_dtype=jnp.float32):
    """obs: (B, obs_dim); params: QNetworkParams from prepare_qnetwork_params().
    Returns (features (B, F), q_values (B, A)).
    features default to bf16 (halves the dominant HBM writeback); pass
    features_dtype=jnp.float32 if downstream consumers need full precision."""
    global _single_buffer_weights_ok

    B, obs_dim = obs.shape
    F, A = params.features_dim, params.action_dim
    f_pad, a_pad = params.w1.shape[1], params.w2.shape[1]
    assert params.w1.shape[0] == obs_dim, "obs_dim mismatch with prepared params"

    budget = _vmem_budget_bytes()
    if tile_b is None:
        tile_b = _choose_tile_b(B, obs_dim, f_pad, a_pad, budget,
                                jnp.dtype(features_dtype).itemsize,
                                jnp.dtype(q_dtype).itemsize,
                                single_buffer_weights=_single_buffer_weights_ok)
    b_pad = _round_up(B, tile_b)
    nb = b_pad // tile_b

    # Keep obs in f32; only materialize a zero-padded copy when the batch has a
    # remainder (avoids the wrapper-side cast/copy anti-pattern).
    obs_in = obs.astype(jnp.float32)
    if b_pad != B:
        obs_in = jnp.zeros((b_pad, obs_dim), jnp.float32).at[:B, :].set(obs_in)

    args = (obs_in, params.w1, params.b1, params.w2, params.b2)
    out = None
    if _single_buffer_weights_ok:
        try:
            out = _build_call(obs_dim, tile_b, nb, b_pad, f_pad, a_pad,
                              features_dtype, q_dtype, budget, True)(*args)
        except Exception:
            _single_buffer_weights_ok = False   # fall back to default double buffering
    if out is None:
        out = _build_call(obs_dim, tile_b, nb, b_pad, f_pad, a_pad,
                          features_dtype, q_dtype, budget, False)(*args)
    feat_p, q_p = out

    # Padded rows/columns hold relu(b1)/b2 garbage — always slice before use.
    return feat_p[:B, :F], q_p[:B, :A]


def _init_linear(key, in_dim, out_dim):
    """Deterministic PyTorch-nn.Linear-style init: U(-1/sqrt(in), 1/sqrt(in)).
       Returned weight is (in_dim, out_dim), i.e. transposed vs torch's (out, in)."""
    kw, kb = jax.random.split(key)
    bound = 1.0 / jnp.sqrt(jnp.float32(in_dim))
    w = jax.random.uniform(kw, (in_dim, out_dim), jnp.float32, -bound, bound)
    b = jax.random.uniform(kb, (1, out_dim), jnp.float32, -bound, bound)
    return w, b


if __name__ == "__main__":
    key = jax.random.PRNGKey(0)
    k_obs, k_repr, k_q = jax.random.split(key, 3)

    # Small shapes consistent with the module: flat observation_shape=16,
    # features_dim=32, action_dim=8, batch=2.
    B, obs_dim, features_dim, action_dim = 2, 16, 32, 8

    obs = jax.random.normal(k_obs, (B, obs_dim), jnp.float32)
    w_repr, b_repr = _init_linear(k_repr, obs_dim, features_dim)
    w_q, b_q = _init_linear(k_q, features_dim, action_dim)

    # One-time parameter preprocessing (hoisted out of the per-call forward path).
    params = prepare_qnetwork_params(w_repr, b_repr, w_q, b_q)

    features, q_values = qnetwork_forward(obs, params)
    jax.block_until_ready((features, q_values))

    assert features.shape == (B, features_dim)
    assert q_values.shape == (B, action_dim)

    # Reference with the same bf16-input / f32-accumulate numerics as the kernel.
    feat_ref = jnp.maximum(
        jnp.dot(obs.astype(jnp.bfloat16), w_repr.astype(jnp.bfloat16),
                preferred_element_type=jnp.float32) + b_repr, 0.0)
    q_ref = jnp.dot(feat_ref.astype(jnp.bfloat16), w_q.astype(jnp.bfloat16),
                    preferred_element_type=jnp.float32) + b_q

    # features emitted as bf16 -> compare with bf16-rounding-sized tolerance.
    assert jnp.allclose(features.astype(jnp.float32), feat_ref,
                        atol=2e-2, rtol=2e-2), "features mismatch"
    assert jnp.allclose(q_values, q_ref, atol=2e-3, rtol=2e-3), "q_values mismatch"

    # Loose sanity check against full-f32 math (bf16 inputs => bounded drift only).
    feat_f32 = jnp.maximum(obs @ w_repr + b_repr, 0.0)
    q_f32 = feat_f32 @ w_q + b_q
    assert jnp.allclose(features.astype(jnp.float32), feat_f32, atol=1e-1), \
        "features far from f32 reference"
    assert jnp.allclose(q_values, q_f32, atol=1e-1), "q_values far from f32 reference"

    # Flag-gated f32-features path (for downstream consumers that need full precision).
    feat32, q32 = qnetwork_forward(obs, params, features_dtype=jnp.float32)
    jax.block_until_ready((feat32, q32))
    assert feat32.dtype == jnp.float32
    assert jnp.allclose(feat32, feat_ref, atol=2e-3, rtol=2e-3), "f32 features mismatch"

    print("KERNEL_OK")
</pallas_src>

<mosaic_0001>
module attributes {stable_mosaic.version = 11 : i64} {
  func.func @_qnetwork_kernel(%arg0: i32, %arg1: memref<8x16xf32, #tpu.memory_space<vmem>>, %arg2: memref<16x128xbf16, #tpu.memory_space<vmem>>, %arg3: memref<1x128xf32, #tpu.memory_space<vmem>>, %arg4: memref<128x128xbf16, #tpu.memory_space<vmem>>, %arg5: memref<1x128xf32, #tpu.memory_space<vmem>>, %arg6: memref<8x128xbf16, #tpu.memory_space<vmem>>, %arg7: memref<8x128xf32, #tpu.memory_space<vmem>>) attributes {dimension_semantics = [#tpu.dimension_semantics<parallel>], iteration_bounds = array<i64: 1>, scalar_prefetch = 0 : i64, scratch_operands = 0 : i64, tpu.core_type = #tpu.core_type<tc>, window_params = [{transform_indices = @transform_0, window_bounds = array<i64: 8, 16>}, {pipeline_mode = #tpu.pipeline_mode<synchronous>, transform_indices = @transform_1, window_bounds = array<i64: 16, 128>}, {pipeline_mode = #tpu.pipeline_mode<synchronous>, transform_indices = @transform_2, window_bounds = array<i64: 1, 128>}, {pipeline_mode = #tpu.pipeline_mode<synchronous>, transform_indices = @transform_3, window_bounds = array<i64: 128, 128>}, {pipeline_mode = #tpu.pipeline_mode<synchronous>, transform_indices = @transform_4, window_bounds = array<i64: 1, 128>}, {transform_indices = @transform_5, window_bounds = array<i64: 8, 128>}, {transform_indices = @transform_6, window_bounds = array<i64: 8, 128>}]} {
    %c0 = arith.constant 0 : index
    %c0_0 = arith.constant 0 : index
    %0 = vector.load %arg1[%c0, %c0_0] : memref<8x16xf32, #tpu.memory_space<vmem>>, vector<8x16xf32>
    %1 = arith.truncf %0 : vector<8x16xf32> to vector<8x16xbf16>
    %c0_1 = arith.constant 0 : index
    %c0_2 = arith.constant 0 : index
    %2 = vector.load %arg2[%c0_1, %c0_2] : memref<16x128xbf16, #tpu.memory_space<vmem>>, vector<16x128xbf16>
    %cst = arith.constant dense<0.000000e+00> : vector<8x128xf32>
    %3 = tpu.matmul %1, %2, %cst {dimension_numbers = #tpu.dot_dimension_numbers<[1], [0], [0], [1], [0, 0, 1, 1], [], []>} : vector<8x16xbf16>, vector<16x128xbf16>, vector<8x128xf32> -> vector<8x128xf32>
    %c0_3 = arith.constant 0 : index
    %c0_4 = arith.constant 0 : index
    %4 = vector.load %arg3[%c0_3, %c0_4] : memref<1x128xf32, #tpu.memory_space<vmem>>, vector<1x128xf32>
    %5 = vector.broadcast %4 : vector<1x128xf32> to vector<8x128xf32>
    %6 = arith.addf %3, %5 : vector<8x128xf32>
    %cst_5 = arith.constant 0.000000e+00 : f32
    %7 = vector.broadcast %cst_5 : f32 to vector<8x128xf32>
    %8 = arith.maximumf %6, %7 : vector<8x128xf32>
    %9 = arith.truncf %8 : vector<8x128xf32> to vector<8x128xbf16>
    %c0_6 = arith.constant 0 : index
    %c0_7 = arith.constant 0 : index
    %10 = vector.load %arg6[%c0_6, %c0_7] : memref<8x128xbf16, #tpu.memory_space<vmem>>, vector<8x128xbf16>
    tpu.vector_store %arg6[%c0_6, %c0_7], %9 {strides = array<i32>} : memref<8x128xbf16, #tpu.memory_space<vmem>>, vector<8x128xbf16>,
    %11 = arith.truncf %8 : vector<8x128xf32> to vector<8x128xbf16>
    %c0_8 = arith.constant 0 : index
    %c0_9 = arith.constant 0 : index
    %12 = vector.load %arg4[%c0_8, %c0_9] : memref<128x128xbf16, #tpu.memory_space<vmem>>, vector<128x128xbf16>
    %cst_10 = arith.constant dense<0.000000e+00> : vector<8x128xf32>
    %13 = tpu.matmul %11, %12, %cst_10 {dimension_numbers = #tpu.dot_dimension_numbers<[1], [0], [0], [1], [0, 0, 1, 1], [], []>} : vector<8x128xbf16>, vector<128x128xbf16>, vector<8x128xf32> -> vector<8x128xf32>
    %c0_11 = arith.constant 0 : index
    %c0_12 = arith.constant 0 : index
    %14 = vector.load %arg5[%c0_11, %c0_12] : memref<1x128xf32, #tpu.memory_space<vmem>>, vector<1x128xf32>
    %15 = vector.broadcast %14 : vector<1x128xf32> to vector<8x128xf32>
    %16 = arith.addf %13, %15 : vector<8x128xf32>
    %c0_13 = arith.constant 0 : index
    %c0_14 = arith.constant 0 : index
    %17 = vector.load %arg7[%c0_13, %c0_14] : memref<8x128xf32, #tpu.memory_space<vmem>>, vector<8x128xf32>
    tpu.vector_store %arg7[%c0_13, %c0_14], %16 {strides = array<i32>} : memref<8x128xf32, #tpu.memory_space<vmem>>, vector<8x128xf32>,
    return
  }
  func.func @transform_0(%arg0: i32) -> (i32, i32) {
    %c0_i32 = arith.constant 0 : i32
    %c0_i32_0 = arith.constant 0 : i32
    return %arg0, %c0_i32 : i32, i32
  }
  func.func @transform_1(%arg0: i32) -> (i32, i32) {
    %c0_i32 = arith.constant 0 : i32
    %c0_i32_0 = arith.constant 0 : i32
    %c0_i32_1 = arith.constant 0 : i32
    return %c0_i32, %c0_i32_0 : i32, i32
  }
  func.func @transform_2(%arg0: i32) -> (i32, i32) {
    %c0_i32 = arith.constant 0 : i32
    %c0_i32_0 = arith.constant 0 : i32
    %c0_i32_1 = arith.constant 0 : i32
    return %c0_i32, %c0_i32_0 : i32, i32
  }
  func.func @transform_3(%arg0: i32) -> (i32, i32) {
    %c0_i32 = arith.constant 0 : i32
    %c0_i32_0 = arith.constant 0 : i32
    %c0_i32_1 = arith.constant 0 : i32
    return %c0_i32, %c0_i32_0 : i32, i32
  }
  func.func @transform_4(%arg0: i32) -> (i32, i32) {
    %c0_i32 = arith.constant 0 : i32
    %c0_i32_0 = arith.constant 0 : i32
    %c0_i32_1 = arith.constant 0 : i32
    return %c0_i32, %c0_i32_0 : i32, i32
  }
  func.func @transform_5(%arg0: i32) -> (i32, i32) {
    %c0_i32 = arith.constant 0 : i32
    %c0_i32_0 = arith.constant 0 : i32
    return %arg0, %c0_i32 : i32, i32
  }
  func.func @transform_6(%arg0: i32) -> (i32, i32) {
    %c0_i32 = arith.constant 0 : i32
    %c0_i32_0 = arith.constant 0 : i32
    return %arg0, %c0_i32 : i32, i32
  }
}

module attributes {stable_mosaic.version = 11 : i64} {
  func.func @_qnetwork_kernel(%arg0: i32, %arg1: memref<8x16xf32, #tpu.memory_space<vmem>>, %arg2: memref<16x128xbf16, #tpu.memory_space<vmem>>, %arg3: memref<1x128xf32, #tpu.memory_space<vmem>>, %arg4: memref<128x128xbf16, #tpu.memory_space<vmem>>, %arg5: memref<1x128xf32, #tpu.memory_space<vmem>>, %arg6: memref<8x128xbf16, #tpu.memory_space<vmem>>, %arg7: memref<8x128xf32, #tpu.memory_space<vmem>>) attributes {dimension_semantics = [#tpu.dimension_semantics<parallel>], iteration_bounds = array<i64: 1>, scalar_prefetch = 0 : i64, scratch_operands = 0 : i64, tpu.core_type = #tpu.core_type<tc>, window_params = [{transform_indices = @transform_0, window_bounds = array<i64: 8, 16>}, {pipeline_mode = #tpu.pipeline_mode<synchronous>, transform_indices = @transform_1, window_bounds = array<i64: 16, 128>}, {pipeline_mode = #tpu.pipeline_mode<synchronous>, transform_indices = @transform_2, window_bounds = array<i64: 1, 128>}, {pipeline_mode = #tpu.pipeline_mode<synchronous>, transform_indices = @transform_3, window_bounds = array<i64: 128, 128>}, {pipeline_mode = #tpu.pipeline_mode<synchronous>, transform_indices = @transform_4, window_bounds = array<i64: 1, 128>}, {transform_indices = @transform_5, window_bounds = array<i64: 8, 128>}, {transform_indices = @transform_6, window_bounds = array<i64: 8, 128>}]} {
    %c0 = arith.constant 0 : index
    %c0_0 = arith.constant 0 : index
    %0 = vector.load %arg1[%c0, %c0_0] : memref<8x16xf32, #tpu.memory_space<vmem>>, vector<8x16xf32>
    %1 = arith.truncf %0 : vector<8x16xf32> to vector<8x16xbf16>
    %c0_1 = arith.constant 0 : index
    %c0_2 = arith.constant 0 : index
    %2 = vector.load %arg2[%c0_1, %c0_2] : memref<16x128xbf16, #tpu.memory_space<vmem>>, vector<16x128xbf16>
    %cst = arith.constant dense<0.000000e+00> : vector<8x128xf32>
    %3 = tpu.matmul %1, %2, %cst {dimension_numbers = #tpu.dot_dimension_numbers<[1], [0], [0], [1], [0, 0, 1, 1], [], []>} : vector<8x16xbf16>, vector<16x128xbf16>, vector<8x128xf32> -> vector<8x128xf32>
    %c0_3 = arith.constant 0 : index
    %c0_4 = arith.constant 0 : index
    %4 = vector.load %arg3[%c0_3, %c0_4] : memref<1x128xf32, #tpu.memory_space<vmem>>, vector<1x128xf32>
    %5 = vector.broadcast %4 : vector<1x128xf32> to vector<8x128xf32>
    %6 = arith.addf %3, %5 : vector<8x128xf32>
    %cst_5 = arith.constant 0.000000e+00 : f32
    %7 = vector.broadcast %cst_5 : f32 to vector<8x128xf32>
    %8 = arith.maximumf %6, %7 : vector<8x128xf32>
    %9 = arith.truncf %8 : vector<8x128xf32> to vector<8x128xbf16>
    %c0_6 = arith.constant 0 : index
    %c0_7 = arith.constant 0 : index
    %10 = vector.load %arg6[%c0_6, %c0_7] : memref<8x128xbf16, #tpu.memory_space<vmem>>, vector<8x128xbf16>
    tpu.vector_store %arg6[%c0_6, %c0_7], %9 {strides = array<i32>} : memref<8x128xbf16, #tpu.memory_space<vmem>>, vector<8x128xbf16>,
    %11 = arith.truncf %8 : vector<8x128xf32> to vector<8x128xbf16>
    %c0_8 = arith.constant 0 : index
    %c0_9 = arith.constant 0 : index
    %12 = vector.load %arg4[%c0_8, %c0_9] : memref<128x128xbf16, #tpu.memory_space<vmem>>, vector<128x128xbf16>
    %cst_10 = arith.constant dense<0.000000e+00> : vector<8x128xf32>
    %13 = tpu.matmul %11, %12, %cst_10 {dimension_numbers = #tpu.dot_dimension_numbers<[1], [0], [0], [1], [0, 0, 1, 1], [], []>} : vector<8x128xbf16>, vector<128x128xbf16>, vector<8x128xf32> -> vector<8x128xf32>
    %c0_11 = arith.constant 0 : index
    %c0_12 = arith.constant 0 : index
    %14 = vector.load %arg5[%c0_11, %c0_12] : memref<1x128xf32, #tpu.memory_space<vmem>>, vector<1x128xf32>
    %15 = vector.broadcast %14 : vector<1x128xf32> to vector<8x128xf32>
    %16 = arith.addf %13, %15 : vector<8x128xf32>
    %c0_13 = arith.constant 0 : index
    %c0_14 = arith.constant 0 : index
    %17 = vector.load %arg7[%c0_13, %c0_14] : memref<8x128xf32, #tpu.memory_space<vmem>>, vector<8x128xf32>
    tpu.vector_store %arg7[%c0_13, %c0_14], %16 {strides = array<i32>} : memref<8x128xf32, #tpu.memory_space<vmem>>, vector<8x128xf32>,
    return
  }
  func.func @transform_0(%arg0: i32) -> (i32, i32) {
    %c0_i32 = arith.constant 0 : i32
    %c0_i32_0 = arith.constant 0 : i32
    return %arg0, %c0_i32 : i32, i32
  }
  func.func @transform_1(%arg0: i32) -> (i32, i32) {
    %c0_i32 = arith.constant 0 : i32
    %c0_i32_0 = arith.constant 0 : i32
    %c0_i32_1 = arith.constant 0 : i32
    return %c0_i32, %c0_i32_0 : i32, i32
  }
  func.func @transform_2(%arg0: i32) -> (i32, i32) {
    %c0_i32 = arith.constant 0 : i32
    %c0_i32_0 = arith.constant 0 : i32
    %c0_i32_1 = arith.constant 0 : i32
    return %c0_i32, %c0_i32_0 : i32, i32
  }
  func.func @transform_3(%arg0: i32) -> (i32, i32) {
    %c0_i32 = arith.constant 0 : i32
    %c0_i32_0 = arith.constant 0 : i32
    %c0_i32_1 = arith.constant 0 : i32
    return %c0_i32, %c0_i32_0 : i32, i32
  }
  func.func @transform_4(%arg0: i32) -> (i32, i32) {
    %c0_i32 = arith.constant 0 : i32
    %c0_i32_0 = arith.constant 0 : i32
    %c0_i32_1 = arith.constant 0 : i32
    return %c0_i32, %c0_i32_0 : i32, i32
  }
  func.func @transform_5(%arg0: i32) -> (i32, i32) {
    %c0_i32 = arith.constant 0 : i32
    %c0_i32_0 = arith.constant 0 : i32
    return %arg0, %c0_i32 : i32, i32
  }
  func.func @transform_6(%arg0: i32) -> (i32, i32) {
    %c0_i32 = arith.constant 0 : i32
    %c0_i32_0 = arith.constant 0 : i32
    return %arg0, %c0_i32 : i32, i32
  }
}

</mosaic_0001>

<llo_original>
// kernel: tpu_custom_call.1
$region0: #{tpu_custom_call.1}
  #allocation0 [shape = 'u32[]', space=smem, size = 0x4, offset = 0x4, fixed_abs, tag = 'smem constant byte address 0x4 - core index']
  #allocation1 [shape = 'u32[144,128]{1,0:T(1,128)}', space=vmem, size = 0x12000, scoped, tag = 'internal scratch']
  %s0 = inlined_call_operand.hbm [shape: f32[8,16], index: 0, kind: input, shape index: {}]
  %s1 = inlined_call_operand.hbm [shape: bf16[16,128], index: 1, kind: input, shape index: {}]
  %s2 = inlined_call_operand.vmem [shape: f32[1,128], index: 2, kind: input, shape index: {}]
  %s3 = inlined_call_operand.hbm [shape: bf16[128,128], index: 3, kind: input, shape index: {}]
  %s4 = inlined_call_operand.vmem [shape: f32[1,128], index: 4, kind: input, shape index: {}]
  %s5 = inlined_call_operand.hbm [shape: bf16[8,128], index: 5, kind: output, shape index: {0}]
  %s6 = inlined_call_operand.hbm [shape: f32[8,128], index: 6, kind: output, shape index: {1}]
  %7 = xla_tuple %s5, %s6
  %s8 = sld [smem:[#allocation0]]
  $region50: #{tpu_custom_call.1} parent=0
    _
  %s10 = ssub.s32 1, %s8
  %s11 = scalar_select 0, %s10, %s8
  $region1: #{tpu_custom_call.1} parent=0
    #allocation2 [shape = 'u8[4096]{0}', space=vmem, size = 0x1000, scoped, tag = 'input window, operand 0, single buffered']
    #allocation3 [shape = 's32[1]{0}', space=sflag, size = 0x4, scoped, tag = 'scoped memory for tpu_custom_call.1']
    #allocation4 [shape = 's32[1]{0}', space=sflag, size = 0x4, scoped, tag = 'scoped memory for tpu_custom_call.1']
    #allocation5 [shape = 'u8[4096]{0}', space=vmem, size = 0x1000, scoped, tag = 'input window, operand 1, single buffered']
    #allocation6 [shape = 's32[1]{0}', space=sflag, size = 0x4, scoped, tag = 'scoped memory for tpu_custom_call.1']
    #allocation7 [shape = 'u8[32768]{0}', space=vmem, size = 0x8000, scoped, tag = 'input window, operand 3, single buffered']
    #allocation8 [shape = 'u8[2048]{0}', space=vmem, size = 0x800, scoped, tag = 'output window, operand 0, single buffered']
    #allocation9 [shape = 'u8[4096]{0}', space=vmem, size = 0x1000, scoped, tag = 'output window, operand 1, single buffered']
    #allocation10 [shape = 's32[1]{0}', space=sflag, size = 0x4, scoped, tag = 'scoped memory for tpu_custom_call.1']
    %12 = vsyncpa [#allocation3], 0
    %13 = vsyncpa [#allocation6], 0
    %14 = vsyncpa [#allocation4], 0
    %15 = vsyncpa [#allocation10], 0
    // Predicated region
    $region2: #{tpu_custom_call.1} parent=1 // pred_check
      _
    $region3: #{tpu_custom_call.1} parent=1 // pred_check_branch
      %17 = sbr.rel (0) target = $region5
    $region4: #{tpu_custom_call.1} parent=1 // pred_region
      %s19 = ssub.s32 128, 128
      %20 = vsyncadd [#allocation3], %s19
      %s22 = sshll.u32 [#allocation2], 4
      %s23 = int_to_ptr.vmem [resolvable:$true] %s22
      %25 = dma.hbm_to_vmem [thread:$0]  %s0, 128, %s23, [#allocation3]
    $region5: #{tpu_custom_call.1} parent=1 // pred_fallthru
      _
    // Predicated region
    $region6: #{tpu_custom_call.1} parent=1 // pred_check
      _
    $region7: #{tpu_custom_call.1} parent=1 // pred_check_branch
      %27 = sbr.rel (0) target = $region9
    $region8: #{tpu_custom_call.1} parent=1 // pred_region
      %s29 = ssub.s32 128, 128
      %30 = vsyncadd [#allocation6], %s29
      %s31 = sshll.u32 [#allocation5], 4
      %s32 = int_to_ptr.vmem [resolvable:$true] %s31
      %37 = dma.hbm_to_vmem [thread:$0]  %s1, 128, %s32, [#allocation6], 64, 64, 4
    $region9: #{tpu_custom_call.1} parent=1 // pred_fallthru
      _
    // Predicated region
    $region10: #{tpu_custom_call.1} parent=1 // pred_check
      _
    $region11: #{tpu_custom_call.1} parent=1 // pred_check_branch
      %39 = sbr.rel (0) target = $region13
    $region12: #{tpu_custom_call.1} parent=1 // pred_region
      _
    $region13: #{tpu_custom_call.1} parent=1 // pred_fallthru
      _
    // Predicated region
    $region14: #{tpu_custom_call.1} parent=1 // pred_check
      _
    $region15: #{tpu_custom_call.1} parent=1 // pred_check_branch
      %41 = sbr.rel (0) target = $region17
    $region16: #{tpu_custom_call.1} parent=1 // pred_region
      %s43 = ssub.s32 1024, 1024
      %44 = vsyncadd [#allocation6], %s43
      %s45 = sshll.u32 [#allocation7], 4
      %s46 = int_to_ptr.vmem [resolvable:$true] %s45
      %51 = dma.hbm_to_vmem [thread:$0]  %s3, 1024, %s46, [#allocation6], 64, 64, 4
    $region17: #{tpu_custom_call.1} parent=1 // pred_fallthru
      _
    // Predicated region
    $region18: #{tpu_custom_call.1} parent=1 // pred_check
      _
    $region19: #{tpu_custom_call.1} parent=1 // pred_check_branch
      %53 = sbr.rel (0) target = $region21
    $region20: #{tpu_custom_call.1} parent=1 // pred_region
      _
    $region21: #{tpu_custom_call.1} parent=1 // pred_fallthru
      _
    // Predicated region
    $region22: #{tpu_custom_call.1} parent=1 // pred_check
      _
    $region23: #{tpu_custom_call.1} parent=1 // pred_check_branch
      %55 = sbr.rel (0) target = $region25
    $region24: #{tpu_custom_call.1} parent=1 // pred_region
      %56 = dma.done [#allocation3], 128
    $region25: #{tpu_custom_call.1} parent=1 // pred_fallthru
      _
    // Predicated region
    $region26: #{tpu_custom_call.1} parent=1 // pred_check
      _
    $region27: #{tpu_custom_call.1} parent=1 // pred_check_branch
      %58 = sbr.rel (0) target = $region29
    $region28: #{tpu_custom_call.1} parent=1 // pred_region
      %59 = dma.done [#allocation6], 128
    $region29: #{tpu_custom_call.1} parent=1 // pred_fallthru
      _
    // Predicated region
    $region30: #{tpu_custom_call.1} parent=1 // pred_check
      _
    $region31: #{tpu_custom_call.1} parent=1 // pred_check_branch
      %61 = sbr.rel (0) target = $region33
    $region32: #{tpu_custom_call.1} parent=1 // pred_region
      %62 = dma.done [#allocation6], 1024
    $region33: #{tpu_custom_call.1} parent=1 // pred_fallthru
      _
    %v64 = vld [vmem:[#allocation2] sm:$0xff]
    %v65 = vpack.c.bf16 %v64, %v64
    %v66 = vld [vmem:[#allocation5] sm:$0xf]
    %v67 = vld [vmem:[#allocation5 + $0x4] sm:$0xf]
    %v68 = vld [vmem:[%s2] sm:$0x1]
    %v70 = vlaneseq
    %v71 = vshrl.u32 %v70, 7
    %v72 = vsub.s32 0, %v71
    %v73 = vrot.slane %v68, %v72
    %v77 = vunpack.c.l.b16 %v66
    %v78 = vunpack.c.l.b16 %v67
    %v79 = vpack.c.b16 %v78, %v77
    %vm81 = vcmask 130048
    %v83 = vsel %vm81, %v65, 0
    %85 = vmatprep.subr.bf16.mxu0 0
    %86 = vmatpush1.bf16.msra.mxu0 %v79
    %87 = vmatprep.subr.bf16.mxu0 0
    %88 = vmatpush1.bf16.msra.mxu0 0
    %89 = vmatprep.subr.bf16.mxu0 0
    %90 = vmatpush1.bf16.msra.mxu0 0
    %91 = vmatprep.subr.bf16.mxu0 0
    %92 = vmatpush1.bf16.msra.mxu0 0
    %93 = vmatprep.subr.bf16.mxu0 0
    %94 = vmatpush1.bf16.msra.mxu0 0
    %95 = vmatprep.subr.bf16.mxu0 0
    %96 = vmatpush1.bf16.msra.mxu0 0
    %97 = vmatprep.subr.bf16.mxu0 0
    %98 = vmatpush1.bf16.msra.mxu0 0
    %99 = vmatprep.subr.bf16.mxu0 0
    %100 = vmatpush1.bf16.msra.mxu0 0
    %101 = vmatprep.subr.bf16.mxu0 0
    %102 = vmatpush1.bf16.msra.mxu0 0
    %103 = vmatprep.subr.bf16.mxu0 0
    %104 = vmatpush1.bf16.msra.mxu0 0
    %105 = vmatprep.subr.bf16.mxu0 0
    %106 = vmatpush1.bf16.msra.mxu0 0
    %107 = vmatprep.subr.bf16.mxu0 0
    %108 = vmatpush1.bf16.msra.mxu0 0
    %109 = vmatprep.subr.bf16.mxu0 0
    %110 = vmatpush1.bf16.msra.mxu0 0
    %111 = vmatprep.subr.bf16.mxu0 0
    %112 = vmatpush1.bf16.msra.mxu0 0
    %113 = vmatprep.subr.bf16.mxu0 0
    %114 = vmatpush1.bf16.msra.mxu0 0
    %115 = vmatprep.subr.bf16.mxu0 0
    %116 = vmatpush1.bf16.msra.mxu0 0
    %117 = vmatprep.mubr.bf16.mxu0 0
    %118 = vmatmul.mubr.bf16.gmra.mrb[0].mxu0 %v83
    %v119 = vpop.f32.mrb[0].mxu0
    %v120 = vadd.f32 %v73, %v119
    %v121 = vpop.f32.mrb[0].mxu0
    %v122 = vpop.f32.mrb[0].mxu0
    %v123 = vpop.f32.mrb[0].mxu0
    %124 = vdwg.mxu0
    %v125 = vmax.f32 %v120, 0.0
    %v126 = vpack.c.bf16 %v125, %v125
    %127 = vst [vmem:[#allocation8] sm:$0xf] %v126
    %v128 = vld [vmem:[#allocation7] sm:$0xf]
    %v129 = vld [vmem:[#allocation7 + $0x4] sm:$0xf]
    %v130 = vld [vmem:[#allocation7 + $0x8] sm:$0xf]
    %v131 = vld [vmem:[#allocation7 + $0xc] sm:$0xf]
    %v132 = vld [vmem:[#allocation7 + $0x10] sm:$0xf]
    %v133 = vld [vmem:[#allocation7 + $0x14] sm:$0xf]
    %v134 = vld [vmem:[#allocation7 + $0x18] sm:$0xf]
    %v135 = vld [vmem:[#allocation7 + $0x1c] sm:$0xf]
    %v136 = vld [vmem:[#allocation7 + $0x20] sm:$0xf]
    %v137 = vld [vmem:[#allocation7 + $0x24] sm:$0xf]
    %v138 = vld [vmem:[#allocation7 + $0x28] sm:$0xf]
    %v139 = vld [vmem:[#allocation7 + $0x2c] sm:$0xf]
    %v140 = vld [vmem:[#allocation7 + $0x30] sm:$0xf]
    %v141 = vld [vmem:[#allocation7 + $0x34] sm:$0xf]
    %v142 = vld [vmem:[#allocation7 + $0x38] sm:$0xf]
    %v143 = vld [vmem:[#allocation7 + $0x3c] sm:$0xf]
    %v144 = vld [vmem:[%s4] sm:$0x1]
    %v146 = vlaneseq
    %v147 = vshrl.u32 %v146, 7
    %v148 = vsub.s32 0, %v147
    %v149 = vrot.slane %v144, %v148
    %v167 = vunpack.c.l.b16 %v128
    %v168 = vunpack.c.l.b16 %v129
    %v169 = vunpack.c.l.b16 %v130
    %v170 = vunpack.c.l.b16 %v131
    %v171 = vunpack.c.l.b16 %v132
    %v172 = vunpack.c.l.b16 %v133
    %v173 = vunpack.c.l.b16 %v134
    %v174 = vunpack.c.l.b16 %v135
    %v175 = vunpack.c.l.b16 %v136
    %v176 = vunpack.c.l.b16 %v137
    %v177 = vunpack.c.l.b16 %v138
    %v178 = vunpack.c.l.b16 %v139
    %v179 = vunpack.c.l.b16 %v140
    %v180 = vunpack.c.l.b16 %v141
    %v181 = vunpack.c.l.b16 %v142
    %v182 = vunpack.c.l.b16 %v143
    %v183 = vpack.c.b16 %v168, %v167
    %v184 = vpack.c.b16 %v170, %v169
    %v185 = vpack.c.b16 %v172, %v171
    %v186 = vpack.c.b16 %v174, %v173
    %v187 = vpack.c.b16 %v176, %v175
    %v188 = vpack.c.b16 %v178, %v177
    %v189 = vpack.c.b16 %v180, %v179
    %v190 = vpack.c.b16 %v182, %v181
    %199 = vmatprep.subr.bf16.mxu0 0
    %200 = vmatpush1.bf16.msra.mxu0 %v183
    %201 = vmatprep.subr.bf16.mxu0 0
    %202 = vmatpush1.bf16.msra.mxu0 %v184
    %203 = vmatprep.subr.bf16.mxu0 0
    %204 = vmatpush1.bf16.msra.mxu0 %v185
    %205 = vmatprep.subr.bf16.mxu0 0
    %206 = vmatpush1.bf16.msra.mxu0 %v186
    %207 = vmatprep.subr.bf16.mxu0 0
    %208 = vmatpush1.bf16.msra.mxu0 %v187
    %209 = vmatprep.subr.bf16.mxu0 0
    %210 = vmatpush1.bf16.msra.mxu0 %v188
    %211 = vmatprep.subr.bf16.mxu0 0
    %212 = vmatpush1.bf16.msra.mxu0 %v189
    %213 = vmatprep.subr.bf16.mxu0 0
    %214 = vmatpush1.bf16.msra.mxu0 %v190
    %215 = vmatprep.subr.bf16.mxu0 0
    %216 = vmatpush1.bf16.msra.mxu0 0
    %217 = vmatprep.subr.bf16.mxu0 0
    %218 = vmatpush1.bf16.msra.mxu0 0
    %219 = vmatprep.subr.bf16.mxu0 0
    %220 = vmatpush1.bf16.msra.mxu0 0
    %221 = vmatprep.subr.bf16.mxu0 0
    %222 = vmatpush1.bf16.msra.mxu0 0
    %223 = vmatprep.subr.bf16.mxu0 0
    %224 = vmatpush1.bf16.msra.mxu0 0
    %225 = vmatprep.subr.bf16.mxu0 0
    %226 = vmatpush1.bf16.msra.mxu0 0
    %227 = vmatprep.subr.bf16.mxu0 0
    %228 = vmatpush1.bf16.msra.mxu0 0
    %229 = vmatprep.subr.bf16.mxu0 0
    %230 = vmatpush1.bf16.msra.mxu0 0
    %231 = vmatprep.mubr.bf16.mxu0 0
    %232 = vmatmul.mubr.bf16.gmra.mrb[0].mxu0 %v126
    %v233 = vpop.f32.mrb[0].mxu0
    %v234 = vadd.f32 %v149, %v233
    %v235 = vpop.f32.mrb[0].mxu0
    %v236 = vpop.f32.mrb[0].mxu0
    %v237 = vpop.f32.mrb[0].mxu0
    %238 = vdwg.mxu0
    %239 = vst [vmem:[#allocation9] sm:$0xff] %v234
    // Predicated region
    $region34: #{tpu_custom_call.1} parent=1 // pred_check
      _
    $region35: #{tpu_custom_call.1} parent=1 // pred_check_branch
      %241 = sbr.rel (0) target = $region37
    $region36: #{tpu_custom_call.1} parent=1 // pred_region
      %s243 = ssub.s32 64, 64
      %244 = vsyncadd [#allocation4], %s243
      %s246 = sshll.u32 [#allocation8], 4
      %s247 = int_to_ptr.vmem [resolvable:$true] %s246
      %249 = dma.vmem_to_hbm [thread:$0]  %s247, 64, %s5, [#allocation4]
    $region37: #{tpu_custom_call.1} parent=1 // pred_fallthru
      _
    // Predicated region
    $region38: #{tpu_custom_call.1} parent=1 // pred_check
      _
    $region39: #{tpu_custom_call.1} parent=1 // pred_check_branch
      %251 = sbr.rel (0) target = $region41
    $region40: #{tpu_custom_call.1} parent=1 // pred_region
      %s253 = ssub.s32 128, 128
      %254 = vsyncadd [#allocation10], %s253
      %s256 = sshll.u32 [#allocation9], 4
      %s257 = int_to_ptr.vmem [resolvable:$true] %s256
      %259 = dma.vmem_to_hbm [thread:$0]  %s257, 128, %s6, [#allocation10]
    $region41: #{tpu_custom_call.1} parent=1 // pred_fallthru
      _
    // Predicated region
    $region42: #{tpu_custom_call.1} parent=1 // pred_check
      _
    $region43: #{tpu_custom_call.1} parent=1 // pred_check_branch
      %261 = sbr.rel (0) target = $region45
    $region44: #{tpu_custom_call.1} parent=1 // pred_region
      %262 = dma.done [#allocation4], 64
    $region45: #{tpu_custom_call.1} parent=1 // pred_fallthru
      _
    // Predicated region
    $region46: #{tpu_custom_call.1} parent=1 // pred_check
      _
    $region47: #{tpu_custom_call.1} parent=1 // pred_check_branch
      %264 = sbr.rel (0) target = $region49
    $region48: #{tpu_custom_call.1} parent=1 // pred_region
      %265 = dma.done [#allocation10], 128
    $region49: #{tpu_custom_call.1} parent=1 // pred_fallthru
      _
    %266 = vsyncpa [#allocation3], 1
    %267 = vsyncpa [#allocation6], 1
    %268 = vsyncpa [#allocation4], 1
    %269 = vsyncpa [#allocation10], 1

// kernel: tpu_custom_call.1
$region0: #{tpu_custom_call.1}
  #allocation0 [shape = 'u32[]', space=smem, size = 0x4, offset = 0x4, fixed_abs, tag = 'smem constant byte address 0x4 - core index']
  #allocation1 [shape = 'u32[144,128]{1,0:T(1,128)}', space=vmem, size = 0x12000, scoped, tag = 'internal scratch']
  %s0 = inlined_call_operand.hbm [shape: f32[8,16], index: 0, kind: input, shape index: {}]
  %s1 = inlined_call_operand.hbm [shape: bf16[16,128], index: 1, kind: input, shape index: {}]
  %s2 = inlined_call_operand.vmem [shape: f32[1,128], index: 2, kind: input, shape index: {}]
  %s3 = inlined_call_operand.hbm [shape: bf16[128,128], index: 3, kind: input, shape index: {}]
  %s4 = inlined_call_operand.vmem [shape: f32[1,128], index: 4, kind: input, shape index: {}]
  %s5 = inlined_call_operand.hbm [shape: bf16[8,128], index: 5, kind: output, shape index: {0}]
  %s6 = inlined_call_operand.hbm [shape: f32[8,128], index: 6, kind: output, shape index: {1}]
  %7 = xla_tuple %s5, %s6
  %s8 = sld [smem:[#allocation0]]
  $region50: #{tpu_custom_call.1} parent=0
    _
  %s10 = ssub.s32 1, %s8
  %s11 = scalar_select 0, %s10, %s8
  $region1: #{tpu_custom_call.1} parent=0
    #allocation2 [shape = 'u8[4096]{0}', space=vmem, size = 0x1000, scoped, tag = 'input window, operand 0, single buffered']
    #allocation3 [shape = 's32[1]{0}', space=sflag, size = 0x4, scoped, tag = 'scoped memory for tpu_custom_call.1']
    #allocation4 [shape = 's32[1]{0}', space=sflag, size = 0x4, scoped, tag = 'scoped memory for tpu_custom_call.1']
    #allocation5 [shape = 'u8[4096]{0}', space=vmem, size = 0x1000, scoped, tag = 'input window, operand 1, single buffered']
    #allocation6 [shape = 's32[1]{0}', space=sflag, size = 0x4, scoped, tag = 'scoped memory for tpu_custom_call.1']
    #allocation7 [shape = 'u8[32768]{0}', space=vmem, size = 0x8000, scoped, tag = 'input window, operand 3, single buffered']
    #allocation8 [shape = 'u8[2048]{0}', space=vmem, size = 0x800, scoped, tag = 'output window, operand 0, single buffered']
    #allocation9 [shape = 'u8[4096]{0}', space=vmem, size = 0x1000, scoped, tag = 'output window, operand 1, single buffered']
    #allocation10 [shape = 's32[1]{0}', space=sflag, size = 0x4, scoped, tag = 'scoped memory for tpu_custom_call.1']
    %12 = vsyncpa [#allocation3], 0
    %13 = vsyncpa [#allocation6], 0
    %14 = vsyncpa [#allocation4], 0
    %15 = vsyncpa [#allocation10], 0
    // Predicated region
    $region2: #{tpu_custom_call.1} parent=1 // pred_check
      _
    $region3: #{tpu_custom_call.1} parent=1 // pred_check_branch
      %17 = sbr.rel (0) target = $region5
    $region4: #{tpu_custom_call.1} parent=1 // pred_region
      %s19 = ssub.s32 128, 128
      %20 = vsyncadd [#allocation3], %s19
      %s22 = sshll.u32 [#allocation2], 4
      %s23 = int_to_ptr.vmem [resolvable:$true] %s22
      %25 = dma.hbm_to_vmem [thread:$0]  %s0, 128, %s23, [#allocation3]
    $region5: #{tpu_custom_call.1} parent=1 // pred_fallthru
      _
    // Predicated region
    $region6: #{tpu_custom_call.1} parent=1 // pred_check
      _
    $region7: #{tpu_custom_call.1} parent=1 // pred_check_branch
      %27 = sbr.rel (0) target = $region9
    $region8: #{tpu_custom_call.1} parent=1 // pred_region
      %s29 = ssub.s32 128, 128
      %30 = vsyncadd [#allocation6], %s29
      %s31 = sshll.u32 [#allocation5], 4
      %s32 = int_to_ptr.vmem [resolvable:$true] %s31
      %37 = dma.hbm_to_vmem [thread:$0]  %s1, 128, %s32, [#allocation6], 64, 64, 4
    $region9: #{tpu_custom_call.1} parent=1 // pred_fallthru
      _
    // Predicated region
    $region10: #{tpu_custom_call.1} parent=1 // pred_check
      _
    $region11: #{tpu_custom_call.1} parent=1 // pred_check_branch
      %39 = sbr.rel (0) target = $region13
    $region12: #{tpu_custom_call.1} parent=1 // pred_region
      _
    $region13: #{tpu_custom_call.1} parent=1 // pred_fallthru
      _
    // Predicated region
    $region14: #{tpu_custom_call.1} parent=1 // pred_check
      _
    $region15: #{tpu_custom_call.1} parent=1 // pred_check_branch
      %41 = sbr.rel (0) target = $region17
    $region16: #{tpu_custom_call.1} parent=1 // pred_region
      %s43 = ssub.s32 1024, 1024
      %44 = vsyncadd [#allocation6], %s43
      %s45 = sshll.u32 [#allocation7], 4
      %s46 = int_to_ptr.vmem [resolvable:$true] %s45
      %51 = dma.hbm_to_vmem [thread:$0]  %s3, 1024, %s46, [#allocation6], 64, 64, 4
    $region17: #{tpu_custom_call.1} parent=1 // pred_fallthru
      _
    // Predicated region
    $region18: #{tpu_custom_call.1} parent=1 // pred_check
      _
    $region19: #{tpu_custom_call.1} parent=1 // pred_check_branch
      %53 = sbr.rel (0) target = $region21
    $region20: #{tpu_custom_call.1} parent=1 // pred_region
      _
    $region21: #{tpu_custom_call.1} parent=1 // pred_fallthru
      _
    // Predicated region
    $region22: #{tpu_custom_call.1} parent=1 // pred_check
      _
    $region23: #{tpu_custom_call.1} parent=1 // pred_check_branch
      %55 = sbr.rel (0) target = $region25
    $region24: #{tpu_custom_call.1} parent=1 // pred_region
      %56 = dma.done [#allocation3], 128
    $region25: #{tpu_custom_call.1} parent=1 // pred_fallthru
      _
    // Predicated region
    $region26: #{tpu_custom_call.1} parent=1 // pred_check
      _
    $region27: #{tpu_custom_call.1} parent=1 // pred_check_branch
      %58 = sbr.rel (0) target = $region29
    $region28: #{tpu_custom_call.1} parent=1 // pred_region
      %59 = dma.done [#allocation6], 128
    $region29: #{tpu_custom_call.1} parent=1 // pred_fallthru
      _
    // Predicated region
    $region30: #{tpu_custom_call.1} parent=1 // pred_check
      _
    $region31: #{tpu_custom_call.1} parent=1 // pred_check_branch
      %61 = sbr.rel (0) target = $region33
    $region32: #{tpu_custom_call.1} parent=1 // pred_region
      %62 = dma.done [#allocation6], 1024
    $region33: #{tpu_custom_call.1} parent=1 // pred_fallthru
      _
    %v64 = vld [vmem:[#allocation2] sm:$0xff]
    %v65 = vpack.c.bf16 %v64, %v64
    %v66 = vld [vmem:[#allocation5] sm:$0xf]
    %v67 = vld [vmem:[#allocation5 + $0x4] sm:$0xf]
    %v68 = vld [vmem:[%s2] sm:$0x1]
    %v70 = vlaneseq
    %v71 = vshrl.u32 %v70, 7
    %v72 = vsub.s32 0, %v71
    %v73 = vrot.slane %v68, %v72
    %v77 = vunpack.c.l.b16 %v66
    %v78 = vunpack.c.l.b16 %v67
    %v79 = vpack.c.b16 %v78, %v77
    %vm81 = vcmask 130048
    %v83 = vsel %vm81, %v65, 0
    %85 = vmatprep.subr.bf16.mxu0 0
    %86 = vmatpush1.bf16.msra.mxu0 %v79
    %87 = vmatprep.subr.bf16.mxu0 0
    %88 = vmatpush1.bf16.msra.mxu0 0
    %89 = vmatprep.subr.bf16.mxu0 0
    %90 = vmatpush1.bf16.msra.mxu0 0
    %91 = vmatprep.subr.bf16.mxu0 0
    %92 = vmatpush1.bf16.msra.mxu0 0
    %93 = vmatprep.subr.bf16.mxu0 0
    %94 = vmatpush1.bf16.msra.mxu0 0
    %95 = vmatprep.subr.bf16.mxu0 0
    %96 = vmatpush1.bf16.msra.mxu0 0
    %97 = vmatprep.subr.bf16.mxu0 0
    %98 = vmatpush1.bf16.msra.mxu0 0
    %99 = vmatprep.subr.bf16.mxu0 0
    %100 = vmatpush1.bf16.msra.mxu0 0
    %101 = vmatprep.subr.bf16.mxu0 0
    %102 = vmatpush1.bf16.msra.mxu0 0
    %103 = vmatprep.subr.bf16.mxu0 0
    %104 = vmatpush1.bf16.msra.mxu0 0
    %105 = vmatprep.subr.bf16.mxu0 0
    %106 = vmatpush1.bf16.msra.mxu0 0
    %107 = vmatprep.subr.bf16.mxu0 0
    %108 = vmatpush1.bf16.msra.mxu0 0
    %109 = vmatprep.subr.bf16.mxu0 0
    %110 = vmatpush1.bf16.msra.mxu0 0
    %111 = vmatprep.subr.bf16.mxu0 0
    %112 = vmatpush1.bf16.msra.mxu0 0
    %113 = vmatprep.subr.bf16.mxu0 0
    %114 = vmatpush1.bf16.msra.mxu0 0
    %115 = vmatprep.subr.bf16.mxu0 0
    %116 = vmatpush1.bf16.msra.mxu0 0
    %117 = vmatprep.mubr.bf16.mxu0 0
    %118 = vmatmul.mubr.bf16.gmra.mrb[0].mxu0 %v83
    %v119 = vpop.f32.mrb[0].mxu0
    %v120 = vadd.f32 %v73, %v119
    %v121 = vpop.f32.mrb[0].mxu0
    %v122 = vpop.f32.mrb[0].mxu0
    %v123 = vpop.f32.mrb[0].mxu0
    %124 = vdwg.mxu0
    %v125 = vmax.f32 %v120, 0.0
    %v126 = vpack.c.bf16 %v125, %v125
    %127 = vst [vmem:[#allocation8] sm:$0xf] %v126
    %v128 = vld [vmem:[#allocation7] sm:$0xf]
    %v129 = vld [vmem:[#allocation7 + $0x4] sm:$0xf]
    %v130 = vld [vmem:[#allocation7 + $0x8] sm:$0xf]
    %v131 = vld [vmem:[#allocation7 + $0xc] sm:$0xf]
    %v132 = vld [vmem:[#allocation7 + $0x10] sm:$0xf]
    %v133 = vld [vmem:[#allocation7 + $0x14] sm:$0xf]
    %v134 = vld [vmem:[#allocation7 + $0x18] sm:$0xf]
    %v135 = vld [vmem:[#allocation7 + $0x1c] sm:$0xf]
    %v136 = vld [vmem:[#allocation7 + $0x20] sm:$0xf]
    %v137 = vld [vmem:[#allocation7 + $0x24] sm:$0xf]
    %v138 = vld [vmem:[#allocation7 + $0x28] sm:$0xf]
    %v139 = vld [vmem:[#allocation7 + $0x2c] sm:$0xf]
    %v140 = vld [vmem:[#allocation7 + $0x30] sm:$0xf]
    %v141 = vld [vmem:[#allocation7 + $0x34] sm:$0xf]
    %v142 = vld [vmem:[#allocation7 + $0x38] sm:$0xf]
    %v143 = vld [vmem:[#allocation7 + $0x3c] sm:$0xf]
    %v144 = vld [vmem:[%s4] sm:$0x1]
    %v146 = vlaneseq
    %v147 = vshrl.u32 %v146, 7
    %v148 = vsub.s32 0, %v147
    %v149 = vrot.slane %v144, %v148
    %v167 = vunpack.c.l.b16 %v128
    %v168 = vunpack.c.l.b16 %v129
    %v169 = vunpack.c.l.b16 %v130
    %v170 = vunpack.c.l.b16 %v131
    %v171 = vunpack.c.l.b16 %v132
    %v172 = vunpack.c.l.b16 %v133
    %v173 = vunpack.c.l.b16 %v134
    %v174 = vunpack.c.l.b16 %v135
    %v175 = vunpack.c.l.b16 %v136
    %v176 = vunpack.c.l.b16 %v137
    %v177 = vunpack.c.l.b16 %v138
    %v178 = vunpack.c.l.b16 %v139
    %v179 = vunpack.c.l.b16 %v140
    %v180 = vunpack.c.l.b16 %v141
    %v181 = vunpack.c.l.b16 %v142
    %v182 = vunpack.c.l.b16 %v143
    %v183 = vpack.c.b16 %v168, %v167
    %v184 = vpack.c.b16 %v170, %v169
    %v185 = vpack.c.b16 %v172, %v171
    %v186 = vpack.c.b16 %v174, %v173
    %v187 = vpack.c.b16 %v176, %v175
    %v188 = vpack.c.b16 %v178, %v177
    %v189 = vpack.c.b16 %v180, %v179
    %v190 = vpack.c.b16 %v182, %v181
    %199 = vmatprep.subr.bf16.mxu0 0
    %200 = vmatpush1.bf16.msra.mxu0 %v183
    %201 = vmatprep.subr.bf16.mxu0 0
    %202 = vmatpush1.bf16.msra.mxu0 %v184
    %203 = vmatprep.subr.bf16.mxu0 0
    %204 = vmatpush1.bf16.msra.mxu0 %v185
    %205 = vmatprep.subr.bf16.mxu0 0
    %206 = vmatpush1.bf16.msra.mxu0 %v186
    %207 = vmatprep.subr.bf16.mxu0 0
    %208 = vmatpush1.bf16.msra.mxu0 %v187
    %209 = vmatprep.subr.bf16.mxu0 0
    %210 = vmatpush1.bf16.msra.mxu0 %v188
    %211 = vmatprep.subr.bf16.mxu0 0
    %212 = vmatpush1.bf16.msra.mxu0 %v189
    %213 = vmatprep.subr.bf16.mxu0 0
    %214 = vmatpush1.bf16.msra.mxu0 %v190
    %215 = vmatprep.subr.bf16.mxu0 0
    %216 = vmatpush1.bf16.msra.mxu0 0
    %217 = vmatprep.subr.bf16.mxu0 0
    %218 = vmatpush1.bf16.msra.mxu0 0
    %219 = vmatprep.subr.bf16.mxu0 0
    %220 = vmatpush1.bf16.msra.mxu0 0
    %221 = vmatprep.subr.bf16.mxu0 0
    %222 = vmatpush1.bf16.msra.mxu0 0
    %223 = vmatprep.subr.bf16.mxu0 0
    %224 = vmatpush1.bf16.msra.mxu0 0
    %225 = vmatprep.subr.bf16.mxu0 0
    %226 = vmatpush1.bf16.msra.mxu0 0
    %227 = vmatprep.subr.bf16.mxu0 0
    %228 = vmatpush1.bf16.msra.mxu0 0
    %229 = vmatprep.subr.bf16.mxu0 0
    %230 = vmatpush1.bf16.msra.mxu0 0
    %231 = vmatprep.mubr.bf16.mxu0 0
    %232 = vmatmul.mubr.bf16.gmra.mrb[0].mxu0 %v126
    %v233 = vpop.f32.mrb[0].mxu0
    %v234 = vadd.f32 %v149, %v233
    %v235 = vpop.f32.mrb[0].mxu0
    %v236 = vpop.f32.mrb[0].mxu0
    %v237 = vpop.f32.mrb[0].mxu0
    %238 = vdwg.mxu0
    %239 = vst [vmem:[#allocation9] sm:$0xff] %v234
    // Predicated region
    $region34: #{tpu_custom_call.1} parent=1 // pred_check
      _
    $region35: #{tpu_custom_call.1} parent=1 // pred_check_branch
      %241 = sbr.rel (0) target = $region37
    $region36: #{tpu_custom_call.1} parent=1 // pred_region
      %s243 = ssub.s32 64, 64
      %244 = vsyncadd [#allocation4], %s243
      %s246 = sshll.u32 [#allocation8], 4
      %s247 = int_to_ptr.vmem [resolvable:$true] %s246
      %249 = dma.vmem_to_hbm [thread:$0]  %s247, 64, %s5, [#allocation4]
    $region37: #{tpu_custom_call.1} parent=1 // pred_fallthru
      _
    // Predicated region
    $region38: #{tpu_custom_call.1} parent=1 // pred_check
      _
    $region39: #{tpu_custom_call.1} parent=1 // pred_check_branch
      %251 = sbr.rel (0) target = $region41
    $region40: #{tpu_custom_call.1} parent=1 // pred_region
      %s253 = ssub.s32 128, 128
      %254 = vsyncadd [#allocation10], %s253
      %s256 = sshll.u32 [#allocation9], 4
      %s257 = int_to_ptr.vmem [resolvable:$true] %s256
      %259 = dma.vmem_to_hbm [thread:$0]  %s257, 128, %s6, [#allocation10]
    $region41: #{tpu_custom_call.1} parent=1 // pred_fallthru
      _
    // Predicated region
    $region42: #{tpu_custom_call.1} parent=1 // pred_check
      _
    $region43: #{tpu_custom_call.1} parent=1 // pred_check_branch
      %261 = sbr.rel (0) target = $region45
    $region44: #{tpu_custom_call.1} parent=1 // pred_region
      %262 = dma.done [#allocation4], 64
    $region45: #{tpu_custom_call.1} parent=1 // pred_fallthru
      _
    // Predicated region
    $region46: #{tpu_custom_call.1} parent=1 // pred_check
      _
    $region47: #{tpu_custom_call.1} parent=1 // pred_check_branch
      %264 = sbr.rel (0) target = $region49
    $region48: #{tpu_custom_call.1} parent=1 // pred_region
      %265 = dma.done [#allocation10], 128
    $region49: #{tpu_custom_call.1} parent=1 // pred_fallthru
      _
    %266 = vsyncpa [#allocation3], 1
    %267 = vsyncpa [#allocation6], 1
    %268 = vsyncpa [#allocation4], 1
    %269 = vsyncpa [#allocation10], 1

</llo_original>
